<compile_context>
chip_gen: v7x
topology: tpu7x:2x2x1
jax: 0.10.0
libtpu: 0.0.40
codegen_flags: <defaults>
</compile_context>

<pallas_src>
import jax
import jax.numpy as jnp
from jax import lax
from jax.experimental import pallas as pl
from jax.experimental.pallas import tpu as pltpu


def _round_up(x, m):
    return ((x + m - 1) // m) * m


# ---------------------------------------------------------------------------
# One-time pre-fusion kernel:  B_k = A @ W_k^T   (W_k is torch-layout (out,in))
# ---------------------------------------------------------------------------
def _fuse_kernel(a_ref, w1_ref, w2_ref, w3_ref, b1_ref, b2_ref, b3_ref):
    a = a_ref[...]
    # Contract A's axis 1 with W's 'in' axis (axis 1) -> A @ W^T, no transpose
    # materialized anywhere.
    dn = (((1,), (1,)), ((), ()))
    b1_ref[...] = lax.dot_general(a, w1_ref[...], dn,
                                  preferred_element_type=jnp.float32)
    b2_ref[...] = lax.dot_general(a, w2_ref[...], dn,
                                  preferred_element_type=jnp.float32)
    b3_ref[...] = lax.dot_general(a, w3_ref[...], dn,
                                  preferred_element_type=jnp.float32)


def _fuse_weights(a, w1, w2, w3):
    dim_in = a.shape[0]
    dim_out = w3.shape[0]
    vmem = pl.BlockSpec(memory_space=pltpu.MemorySpace.VMEM)
    return pl.pallas_call(
        _fuse_kernel,
        out_shape=(
            jax.ShapeDtypeStruct((dim_in, dim_in), jnp.float32),
            jax.ShapeDtypeStruct((dim_in, dim_in), jnp.float32),
            jax.ShapeDtypeStruct((dim_in, dim_out), jnp.float32),
        ),
        in_specs=[vmem] * 4,
        out_specs=(vmem, vmem, vmem),
    )(a, w1, w2, w3)


# ---------------------------------------------------------------------------
# Main row-tiled GCN kernel: per row-block of X do
#   h = relu(X @ B1); h = relu(h @ B2); out = h @ B3
# ---------------------------------------------------------------------------
def _gcn_kernel(x_ref, b1_ref, b2_ref, b3_ref, o_ref):
    x = x_ref[...]
    cdt = x.dtype  # compute dtype for MXU inputs (f32 or bf16)

    h = jnp.dot(x, b1_ref[...], preferred_element_type=jnp.float32)
    h = jnp.maximum(h, 0.0).astype(cdt)

    h = jnp.dot(h, b2_ref[...], preferred_element_type=jnp.float32)
    h = jnp.maximum(h, 0.0).astype(cdt)

    out = jnp.dot(h, b3_ref[...], preferred_element_type=jnp.float32)
    o_ref[...] = out.astype(o_ref.dtype)


def gcn_forward(x, a, w1, w2, w3, *, block_rows=256, compute_dtype=jnp.float32):
    """x: (N, dim_in), a: (dim_in, dim_in), w*: torch-shaped (out, in)."""
    n, dim_in = x.shape
    dim_out = w3.shape[0]

    # One-time fusion of propagation + weight matmuls (amortized across rows).
    b1, b2, b3 = _fuse_weights(a, w1, w2, w3)
    b1 = b1.astype(compute_dtype)
    b2 = b2.astype(compute_dtype)
    b3 = b3.astype(compute_dtype)

    xk = x.astype(compute_dtype)

    # Row tile: multiple of 8 (f32/bf16 sublane-safe); pad N so every grid
    # step sees a full block.
    tm = min(block_rows, _round_up(n, 8))
    n_pad = _round_up(n, tm)
    if n_pad != n:
        xk = jnp.pad(xk, ((0, n_pad - n), (0, 0)))

    grid = (n_pad // tm,)

    itemsize = jnp.dtype(compute_dtype).itemsize
    flops = 2 * n_pad * dim_in * (2 * dim_in + dim_out)
    bytes_accessed = (
        n_pad * dim_in * itemsize                              # X read
        + (2 * dim_in * dim_in + dim_in * dim_out) * itemsize  # fused weights
        + n_pad * dim_out * 4                                  # out write (f32)
    )

    out = pl.pallas_call(
        _gcn_kernel,
        out_shape=jax.ShapeDtypeStruct((n_pad, dim_out), jnp.float32),
        grid_spec=pltpu.PrefetchScalarGridSpec(
            num_scalar_prefetch=0,
            grid=grid,
            in_specs=[
                # Streamed row tiles of X.
                pl.BlockSpec((tm, dim_in), lambda i: (i, 0)),
                # Fused weights: same block every step -> VMEM-resident.
                pl.BlockSpec((dim_in, dim_in), lambda i: (0, 0)),
                pl.BlockSpec((dim_in, dim_in), lambda i: (0, 0)),
                pl.BlockSpec((dim_in, dim_out), lambda i: (0, 0)),
            ],
            out_specs=pl.BlockSpec((tm, dim_out), lambda i: (i, 0)),
        ),
        compiler_params=pltpu.CompilerParams(
            # Row blocks are independent -> shard across v7x's 2 TensorCores.
            dimension_semantics=("parallel",),
        ),
        cost_estimate=pl.CostEstimate(
            flops=flops, transcendentals=0, bytes_accessed=bytes_accessed
        ),
    )(xk, b1, b2, b3)

    return out[:n] if n_pad != n else out


# ---------------------------------------------------------------------------
# Pure-JAX references
# ---------------------------------------------------------------------------
def gcn_reference(x, a, w1, w2, w3):
    """Exact PyTorch ordering, full f32 precision."""
    hi = jax.lax.Precision.HIGHEST
    h = jax.nn.relu(jnp.dot(jnp.dot(x, a, precision=hi), w1.T, precision=hi))
    h = jax.nn.relu(jnp.dot(jnp.dot(h, a, precision=hi), w2.T, precision=hi))
    return jnp.dot(jnp.dot(h, a, precision=hi), w3.T, precision=hi)


def gcn_reference_bf16(x, a, w1, w2, w3):
    """Reference mirroring the bf16-input / f32-accumulate kernel path."""
    hi = jax.lax.Precision.HIGHEST
    dn = (((1,), (1,)), ((), ()))
    b1 = lax.dot_general(a, w1, dn, precision=hi).astype(jnp.bfloat16)
    b2 = lax.dot_general(a, w2, dn, precision=hi).astype(jnp.bfloat16)
    b3 = lax.dot_general(a, w3, dn, precision=hi).astype(jnp.bfloat16)
    h = x.astype(jnp.bfloat16)
    h = jnp.maximum(jnp.dot(h, b1, preferred_element_type=jnp.float32), 0.0)
    h = h.astype(jnp.bfloat16)
    h = jnp.maximum(jnp.dot(h, b2, preferred_element_type=jnp.float32), 0.0)
    h = h.astype(jnp.bfloat16)
    return jnp.dot(h, b3, preferred_element_type=jnp.float32)


if __name__ == "__main__":
    key = jax.random.PRNGKey(0)

    # ---- Test 1: lane-dense sizing (128-multiple dims), 2-step row grid ----
    N, DIM_IN, DIM_OUT = 512, 128, 128
    kx, ka, k1, k2, k3 = jax.random.split(key, 5)
    x = jax.random.normal(kx, (N, DIM_IN), dtype=jnp.float32)
    a = jax.random.normal(ka, (DIM_IN, DIM_IN), dtype=jnp.float32) * 0.1
    w1 = jax.random.normal(k1, (DIM_IN, DIM_IN), dtype=jnp.float32) * 0.1
    w2 = jax.random.normal(k2, (DIM_IN, DIM_IN), dtype=jnp.float32) * 0.1
    w3 = jax.random.normal(k3, (DIM_OUT, DIM_IN), dtype=jnp.float32) * 0.1

    out = gcn_forward(x, a, w1, w2, w3, block_rows=256,
                      compute_dtype=jnp.float32)
    jax.block_until_ready(out)
    ref = gcn_reference(x, a, w1, w2, w3)
    assert out.shape == (N, DIM_OUT)
    assert jnp.allclose(out, ref, atol=1e-3, rtol=1e-3), "f32 mismatch"

    # ---- Test 2: bf16 MXU inputs, f32 accumulation (v6e / v7x fast path) ----
    out_bf16 = gcn_forward(x, a, w1, w2, w3, block_rows=256,
                           compute_dtype=jnp.bfloat16)
    jax.block_until_ready(out_bf16)
    ref_bf16 = gcn_reference_bf16(x, a, w1, w2, w3)
    assert jnp.allclose(out_bf16, ref_bf16, atol=2e-2, rtol=2e-2), "bf16 mismatch"

    # ---- Test 3: small non-128-aligned dims (full-array blocks stay legal) ----
    N2, DI2, DO2 = 8, 32, 16
    kx2, ka2, k12, k22, k32 = jax.random.split(jax.random.PRNGKey(1), 5)
    x2 = jax.random.normal(kx2, (N2, DI2), dtype=jnp.float32)
    a2 = jax.random.normal(ka2, (DI2, DI2), dtype=jnp.float32) * 0.1
    w12 = jax.random.normal(k12, (DI2, DI2), dtype=jnp.float32) * 0.1
    w22 = jax.random.normal(k22, (DI2, DI2), dtype=jnp.float32) * 0.1
    w32 = jax.random.normal(k32, (DO2, DI2), dtype=jnp.float32) * 0.1

    out2 = gcn_forward(x2, a2, w12, w22, w32)
    jax.block_until_ready(out2)
    ref2 = gcn_reference(x2, a2, w12, w22, w32)
    assert out2.shape == (N2, DO2)
    assert jnp.allclose(out2, ref2, atol=1e-3, rtol=1e-3), "f32 small mismatch"

    print("KERNEL_OK")
</pallas_src>

<mosaic_0001>
module attributes {stable_mosaic.version = 11 : i64} {
  func.func @_fuse_kernel(%arg0: memref<128x128xf32, #tpu.memory_space<vmem>>, %arg1: memref<128x128xf32, #tpu.memory_space<vmem>>, %arg2: memref<128x128xf32, #tpu.memory_space<vmem>>, %arg3: memref<128x128xf32, #tpu.memory_space<vmem>>, %arg4: memref<128x128xf32, #tpu.memory_space<vmem>>, %arg5: memref<128x128xf32, #tpu.memory_space<vmem>>, %arg6: memref<128x128xf32, #tpu.memory_space<vmem>>) attributes {dimension_semantics = [], scalar_prefetch = 0 : i64, scratch_operands = 0 : i64, tpu.core_type = #tpu.core_type<tc>} {
    %c0 = arith.constant 0 : index
    %c0_0 = arith.constant 0 : index
    %0 = vector.load %arg0[%c0, %c0_0] : memref<128x128xf32, #tpu.memory_space<vmem>>, vector<128x128xf32>
    %c0_1 = arith.constant 0 : index
    %c0_2 = arith.constant 0 : index
    %1 = vector.load %arg1[%c0_1, %c0_2] : memref<128x128xf32, #tpu.memory_space<vmem>>, vector<128x128xf32>
    %cst = arith.constant dense<0.000000e+00> : vector<128x128xf32>
    %2 = tpu.matmul %0, %1, %cst {dimension_numbers = #tpu.dot_dimension_numbers<[1], [1], [0], [0], [0, 0, 1, 0], [], []>} : vector<128x128xf32>, vector<128x128xf32>, vector<128x128xf32> -> vector<128x128xf32>
    %c0_3 = arith.constant 0 : index
    %c0_4 = arith.constant 0 : index
    %3 = vector.load %arg4[%c0_3, %c0_4] : memref<128x128xf32, #tpu.memory_space<vmem>>, vector<128x128xf32>
    tpu.vector_store %arg4[%c0_3, %c0_4], %2 {strides = array<i32>} : memref<128x128xf32, #tpu.memory_space<vmem>>, vector<128x128xf32>,
    %c0_5 = arith.constant 0 : index
    %c0_6 = arith.constant 0 : index
    %4 = vector.load %arg2[%c0_5, %c0_6] : memref<128x128xf32, #tpu.memory_space<vmem>>, vector<128x128xf32>
    %cst_7 = arith.constant dense<0.000000e+00> : vector<128x128xf32>
    %5 = tpu.matmul %0, %4, %cst_7 {dimension_numbers = #tpu.dot_dimension_numbers<[1], [1], [0], [0], [0, 0, 1, 0], [], []>} : vector<128x128xf32>, vector<128x128xf32>, vector<128x128xf32> -> vector<128x128xf32>
    %c0_8 = arith.constant 0 : index
    %c0_9 = arith.constant 0 : index
    %6 = vector.load %arg5[%c0_8, %c0_9] : memref<128x128xf32, #tpu.memory_space<vmem>>, vector<128x128xf32>
    tpu.vector_store %arg5[%c0_8, %c0_9], %5 {strides = array<i32>} : memref<128x128xf32, #tpu.memory_space<vmem>>, vector<128x128xf32>,
    %c0_10 = arith.constant 0 : index
    %c0_11 = arith.constant 0 : index
    %7 = vector.load %arg3[%c0_10, %c0_11] : memref<128x128xf32, #tpu.memory_space<vmem>>, vector<128x128xf32>
    %cst_12 = arith.constant dense<0.000000e+00> : vector<128x128xf32>
    %8 = tpu.matmul %0, %7, %cst_12 {dimension_numbers = #tpu.dot_dimension_numbers<[1], [1], [0], [0], [0, 0, 1, 0], [], []>} : vector<128x128xf32>, vector<128x128xf32>, vector<128x128xf32> -> vector<128x128xf32>
    %c0_13 = arith.constant 0 : index
    %c0_14 = arith.constant 0 : index
    %9 = vector.load %arg6[%c0_13, %c0_14] : memref<128x128xf32, #tpu.memory_space<vmem>>, vector<128x128xf32>
    tpu.vector_store %arg6[%c0_13, %c0_14], %8 {strides = array<i32>} : memref<128x128xf32, #tpu.memory_space<vmem>>, vector<128x128xf32>,
    return
  }
}

</mosaic_0001>

<llo_original>
// kernel: tpu_custom_call.1
$region0: #{tpu_custom_call.1}
  #allocation0 [shape = 'u32[]', space=smem, size = 0x4, offset = 0x4, fixed_abs, tag = 'smem constant byte address 0x4 - core index']
  #allocation1 [shape = 'u32[144,128]{1,0:T(1,128)}', space=vmem, size = 0x12000, scoped, tag = 'internal scratch']
  %s0 = inlined_call_operand.hbm [shape: f32[128,128], index: 0, kind: input, shape index: {}]
  %s1 = inlined_call_operand.hbm [shape: f32[128,128], index: 1, kind: input, shape index: {}]
  %s2 = inlined_call_operand.hbm [shape: f32[128,128], index: 2, kind: input, shape index: {}]
  %s3 = inlined_call_operand.hbm [shape: f32[128,128], index: 3, kind: input, shape index: {}]
  %s4 = inlined_call_operand.hbm [shape: f32[128,128], index: 4, kind: output, shape index: {0}]
  %s5 = inlined_call_operand.hbm [shape: f32[128,128], index: 5, kind: output, shape index: {1}]
  %s6 = inlined_call_operand.hbm [shape: f32[128,128], index: 6, kind: output, shape index: {2}]
  %7 = xla_tuple %s4, %s5, %s6
  %s8 = sld [smem:[#allocation0]]
  $region58: #{tpu_custom_call.1} parent=0
    _
  %s10 = ssub.s32 1, %s8
  %s11 = scalar_select 0, %s10, %s8
  $region1: #{tpu_custom_call.1} parent=0
    #allocation2 [shape = 'u8[65536]{0}', space=vmem, size = 0x10000, scoped, tag = 'input window, operand 0, single buffered']
    #allocation3 [shape = 's32[1]{0}', space=sflag, size = 0x4, scoped, tag = 'scoped memory for tpu_custom_call.1']
    #allocation4 [shape = 's32[1]{0}', space=sflag, size = 0x4, scoped, tag = 'scoped memory for tpu_custom_call.1']
    #allocation5 [shape = 'u8[65536]{0}', space=vmem, size = 0x10000, scoped, tag = 'input window, operand 1, single buffered']
    #allocation6 [shape = 's32[1]{0}', space=sflag, size = 0x4, scoped, tag = 'scoped memory for tpu_custom_call.1']
    #allocation7 [shape = 'u8[65536]{0}', space=vmem, size = 0x10000, scoped, tag = 'input window, operand 2, single buffered']
    #allocation8 [shape = 'u8[65536]{0}', space=vmem, size = 0x10000, scoped, tag = 'input window, operand 3, single buffered']
    #allocation9 [shape = 's32[1]{0}', space=sflag, size = 0x4, scoped, tag = 'scoped memory for tpu_custom_call.1']
    #allocation10 [shape = 'u8[65536]{0}', space=vmem, size = 0x10000, scoped, tag = 'output window, operand 0, single buffered']
    #allocation11 [shape = 'u8[65536]{0}', space=vmem, size = 0x10000, scoped, tag = 'output window, operand 1, single buffered']
    #allocation12 [shape = 's32[1]{0}', space=sflag, size = 0x4, scoped, tag = 'scoped memory for tpu_custom_call.1']
    #allocation13 [shape = 'u8[65536]{0}', space=vmem, size = 0x10000, scoped, tag = 'output window, operand 2, single buffered']
    %12 = vsyncpa [#allocation3], 0
    %13 = vsyncpa [#allocation6], 0
    %14 = vsyncpa [#allocation9], 0
    %15 = vsyncpa [#allocation4], 0
    %16 = vsyncpa [#allocation12], 0
    // Predicated region
    $region2: #{tpu_custom_call.1} parent=1 // pred_check
      _
    $region3: #{tpu_custom_call.1} parent=1 // pred_check_branch
      %18 = sbr.rel (0) target = $region5
    $region4: #{tpu_custom_call.1} parent=1 // pred_region
      %s20 = ssub.s32 2048, 2048
      %21 = vsyncadd [#allocation3], %s20
      %s22 = sshll.u32 [#allocation2], 4
      %s23 = int_to_ptr.vmem [resolvable:$true] %s22
      %28 = dma.hbm_to_vmem [thread:$0]  %s0, 2048, %s23, [#allocation3], 128, 128, 8
    $region5: #{tpu_custom_call.1} parent=1 // pred_fallthru
      _
    // Predicated region
    $region6: #{tpu_custom_call.1} parent=1 // pred_check
      _
    $region7: #{tpu_custom_call.1} parent=1 // pred_check_branch
      %30 = sbr.rel (0) target = $region9
    $region8: #{tpu_custom_call.1} parent=1 // pred_region
      %s32 = ssub.s32 2048, 2048
      %33 = vsyncadd [#allocation6], %s32
      %s34 = sshll.u32 [#allocation5], 4
      %s35 = int_to_ptr.vmem [resolvable:$true] %s34
      %40 = dma.hbm_to_vmem [thread:$0]  %s1, 2048, %s35, [#allocation6], 128, 128, 8
    $region9: #{tpu_custom_call.1} parent=1 // pred_fallthru
      _
    // Predicated region
    $region10: #{tpu_custom_call.1} parent=1 // pred_check
      _
    $region11: #{tpu_custom_call.1} parent=1 // pred_check_branch
      %42 = sbr.rel (0) target = $region13
    $region12: #{tpu_custom_call.1} parent=1 // pred_region
      %s44 = ssub.s32 2048, 2048
      %45 = vsyncadd [#allocation6], %s44
      %s46 = sshll.u32 [#allocation7], 4
      %s47 = int_to_ptr.vmem [resolvable:$true] %s46
      %52 = dma.hbm_to_vmem [thread:$0]  %s2, 2048, %s47, [#allocation6], 128, 128, 8
    $region13: #{tpu_custom_call.1} parent=1 // pred_fallthru
      _
    // Predicated region
    $region14: #{tpu_custom_call.1} parent=1 // pred_check
      _
    $region15: #{tpu_custom_call.1} parent=1 // pred_check_branch
      %54 = sbr.rel (0) target = $region17
    $region16: #{tpu_custom_call.1} parent=1 // pred_region
      %s56 = ssub.s32 2048, 2048
      %57 = vsyncadd [#allocation9], %s56
      %s58 = sshll.u32 [#allocation8], 4
      %s59 = int_to_ptr.vmem [resolvable:$true] %s58
      %64 = dma.hbm_to_vmem [thread:$0]  %s3, 2048, %s59, [#allocation9], 128, 128, 8
    $region17: #{tpu_custom_call.1} parent=1 // pred_fallthru
      _
    // Predicated region
    $region18: #{tpu_custom_call.1} parent=1 // pred_check
      _
    $region19: #{tpu_custom_call.1} parent=1 // pred_check_branch
      %66 = sbr.rel (0) target = $region21
    $region20: #{tpu_custom_call.1} parent=1 // pred_region
      %67 = dma.done [#allocation3], 2048
    $region21: #{tpu_custom_call.1} parent=1 // pred_fallthru
      _
    // Predicated region
    $region22: #{tpu_custom_call.1} parent=1 // pred_check
      _
    $region23: #{tpu_custom_call.1} parent=1 // pred_check_branch
      %69 = sbr.rel (0) target = $region25
    $region24: #{tpu_custom_call.1} parent=1 // pred_region
      %70 = dma.done [#allocation6], 2048
    $region25: #{tpu_custom_call.1} parent=1 // pred_fallthru
      _
    // Predicated region
    $region26: #{tpu_custom_call.1} parent=1 // pred_check
      _
    $region27: #{tpu_custom_call.1} parent=1 // pred_check_branch
      %72 = sbr.rel (0) target = $region29
    $region28: #{tpu_custom_call.1} parent=1 // pred_region
      %73 = dma.done [#allocation6], 2048
    $region29: #{tpu_custom_call.1} parent=1 // pred_fallthru
      _
    // Predicated region
    $region30: #{tpu_custom_call.1} parent=1 // pred_check
      _
    $region31: #{tpu_custom_call.1} parent=1 // pred_check_branch
      %75 = sbr.rel (0) target = $region33
    $region32: #{tpu_custom_call.1} parent=1 // pred_region
      %76 = dma.done [#allocation9], 2048
    $region33: #{tpu_custom_call.1} parent=1 // pred_fallthru
      _
    %v77 = vld [vmem:[#allocation2] sm:$0xff]
    %v78 = vld [vmem:[#allocation2 + $0x8] sm:$0xff]
    %v79 = vld [vmem:[#allocation2 + $0x10] sm:$0xff]
    %v80 = vld [vmem:[#allocation2 + $0x18] sm:$0xff]
    %v81 = vld [vmem:[#allocation2 + $0x20] sm:$0xff]
    %v82 = vld [vmem:[#allocation2 + $0x28] sm:$0xff]
    %v83 = vld [vmem:[#allocation2 + $0x30] sm:$0xff]
    %v84 = vld [vmem:[#allocation2 + $0x38] sm:$0xff]
    %v85 = vld [vmem:[#allocation2 + $0x40] sm:$0xff]
    %v86 = vld [vmem:[#allocation2 + $0x48] sm:$0xff]
    %v87 = vld [vmem:[#allocation2 + $0x50] sm:$0xff]
    %v88 = vld [vmem:[#allocation2 + $0x58] sm:$0xff]
    %v89 = vld [vmem:[#allocation2 + $0x60] sm:$0xff]
    %v90 = vld [vmem:[#allocation2 + $0x68] sm:$0xff]
    %v91 = vld [vmem:[#allocation2 + $0x70] sm:$0xff]
    %v92 = vld [vmem:[#allocation2 + $0x78] sm:$0xff]
    %v93 = vld [vmem:[#allocation5] sm:$0xff]
    %v94 = vld [vmem:[#allocation5 + $0x8] sm:$0xff]
    %v95 = vld [vmem:[#allocation5 + $0x10] sm:$0xff]
    %v96 = vld [vmem:[#allocation5 + $0x18] sm:$0xff]
    %v97 = vld [vmem:[#allocation5 + $0x20] sm:$0xff]
    %v98 = vld [vmem:[#allocation5 + $0x28] sm:$0xff]
    %v99 = vld [vmem:[#allocation5 + $0x30] sm:$0xff]
    %v100 = vld [vmem:[#allocation5 + $0x38] sm:$0xff]
    %v101 = vld [vmem:[#allocation5 + $0x40] sm:$0xff]
    %v102 = vld [vmem:[#allocation5 + $0x48] sm:$0xff]
    %v103 = vld [vmem:[#allocation5 + $0x50] sm:$0xff]
    %v104 = vld [vmem:[#allocation5 + $0x58] sm:$0xff]
    %v105 = vld [vmem:[#allocation5 + $0x60] sm:$0xff]
    %v106 = vld [vmem:[#allocation5 + $0x68] sm:$0xff]
    %v107 = vld [vmem:[#allocation5 + $0x70] sm:$0xff]
    %v108 = vld [vmem:[#allocation5 + $0x78] sm:$0xff]
    %109 = vmatprep.subr.mxu0 0.0
    %110 = vmatpush1.xpose.msra.mxu0 %v93
    %111 = vmatprep.subr.mxu0 0.0
    %112 = vmatpush1.xpose.msra.mxu0 %v94
    %113 = vmatprep.subr.mxu0 0.0
    %114 = vmatpush1.xpose.msra.mxu0 %v95
    %115 = vmatprep.subr.mxu0 0.0
    %116 = vmatpush1.xpose.msra.mxu0 %v96
    %117 = vmatprep.subr.mxu0 0.0
    %118 = vmatpush1.xpose.msra.mxu0 %v97
    %119 = vmatprep.subr.mxu0 0.0
    %120 = vmatpush1.xpose.msra.mxu0 %v98
    %121 = vmatprep.subr.mxu0 0.0
    %122 = vmatpush1.xpose.msra.mxu0 %v99
    %123 = vmatprep.subr.mxu0 0.0
    %124 = vmatpush1.xpose.msra.mxu0 %v100
    %125 = vmatprep.subr.mxu0 0.0
    %126 = vmatpush1.xpose.msra.mxu0 %v101
    %127 = vmatprep.subr.mxu0 0.0
    %128 = vmatpush1.xpose.msra.mxu0 %v102
    %129 = vmatprep.subr.mxu0 0.0
    %130 = vmatpush1.xpose.msra.mxu0 %v103
    %131 = vmatprep.subr.mxu0 0.0
    %132 = vmatpush1.xpose.msra.mxu0 %v104
    %133 = vmatprep.subr.mxu0 0.0
    %134 = vmatpush1.xpose.msra.mxu0 %v105
    %135 = vmatprep.subr.mxu0 0.0
    %136 = vmatpush1.xpose.msra.mxu0 %v106
    %137 = vmatprep.subr.mxu0 0.0
    %138 = vmatpush1.xpose.msra.mxu0 %v107
    %139 = vmatprep.subr.mxu0 0.0
    %140 = vmatpush1.xpose.msra.mxu0 %v108
    %141 = vmatprep.subr.mxu0 0.0
    %142 = vmatpush1.xpose.msra.mxu0 0.0
    %143 = vmatprep.subr.mxu0 0.0
    %144 = vmatpush1.xpose.msra.mxu0 0.0
    %145 = vmatprep.subr.mxu0 0.0
    %146 = vmatpush1.xpose.msra.mxu0 0.0
    %147 = vmatprep.subr.mxu0 0.0
    %148 = vmatpush1.xpose.msra.mxu0 0.0
    %149 = vmatprep.subr.mxu0 0.0
    %150 = vmatpush1.xpose.msra.mxu0 0.0
    %151 = vmatprep.subr.mxu0 0.0
    %152 = vmatpush1.xpose.msra.mxu0 0.0
    %153 = vmatprep.subr.mxu0 0.0
    %154 = vmatpush1.xpose.msra.mxu0 0.0
    %155 = vmatprep.subr.mxu0 0.0
    %156 = vmatpush1.xpose.msra.mxu0 0.0
    %157 = vmatprep.subr.mxu0 0.0
    %158 = vmatpush1.xpose.msra.mxu0 0.0
    %159 = vmatprep.subr.mxu0 0.0
    %160 = vmatpush1.xpose.msra.mxu0 0.0
    %161 = vmatprep.subr.mxu0 0.0
    %162 = vmatpush1.xpose.msra.mxu0 0.0
    %163 = vmatprep.subr.mxu0 0.0
    %164 = vmatpush1.xpose.msra.mxu0 0.0
    %165 = vmatprep.subr.mxu0 0.0
    %166 = vmatpush1.xpose.msra.mxu0 0.0
    %167 = vmatprep.subr.mxu0 0.0
    %168 = vmatpush1.xpose.msra.mxu0 0.0
    %169 = vmatprep.subr.mxu0 0.0
    %170 = vmatpush1.xpose.msra.mxu0 0.0
    %171 = vmatprep.subr.mxu0 0.0
    %172 = vmatpush1.xpose.msra.mxu0 0.0
    %173 = vmatprep.mubr.f32.mxu0 0.0
    %174 = vmatmul.mubr.f32.gmra.mrb[0].mxu0 %v77
    %v175 = vpop.f32.mrb[0].mxu0
    %v176 = vadd.f32 0.0, %v175
    %v177 = vpop.f32.mrb[0].mxu0
    %178 = vmatprep.mubr.f32.mxu0 0.0
    %179 = vmatmul.mubr.f32.gmra.mrb[0].mxu0 %v78
    %v180 = vpop.f32.mrb[0].mxu0
    %v181 = vadd.f32 0.0, %v180
    %v182 = vpop.f32.mrb[0].mxu0
    %183 = vmatprep.mubr.f32.mxu0 0.0
    %184 = vmatmul.mubr.f32.gmra.mrb[0].mxu0 %v79
    %v185 = vpop.f32.mrb[0].mxu0
    %v186 = vadd.f32 0.0, %v185
    %v187 = vpop.f32.mrb[0].mxu0
    %188 = vmatprep.mubr.f32.mxu0 0.0
    %189 = vmatmul.mubr.f32.gmra.mrb[0].mxu0 %v80
    %v190 = vpop.f32.mrb[0].mxu0
    %v191 = vadd.f32 0.0, %v190
    %v192 = vpop.f32.mrb[0].mxu0
    %193 = vmatprep.mubr.f32.mxu0 0.0
    %194 = vmatmul.mubr.f32.gmra.mrb[0].mxu0 %v81
    %v195 = vpop.f32.mrb[0].mxu0
    %v196 = vadd.f32 0.0, %v195
    %v197 = vpop.f32.mrb[0].mxu0
    %198 = vmatprep.mubr.f32.mxu0 0.0
    %199 = vmatmul.mubr.f32.gmra.mrb[0].mxu0 %v82
    %v200 = vpop.f32.mrb[0].mxu0
    %v201 = vadd.f32 0.0, %v200
    %v202 = vpop.f32.mrb[0].mxu0
    %203 = vmatprep.mubr.f32.mxu0 0.0
    %204 = vmatmul.mubr.f32.gmra.mrb[0].mxu0 %v83
    %v205 = vpop.f32.mrb[0].mxu0
    %v206 = vadd.f32 0.0, %v205
    %v207 = vpop.f32.mrb[0].mxu0
    %208 = vmatprep.mubr.f32.mxu0 0.0
    %209 = vmatmul.mubr.f32.gmra.mrb[0].mxu0 %v84
    %v210 = vpop.f32.mrb[0].mxu0
    %v211 = vadd.f32 0.0, %v210
    %v212 = vpop.f32.mrb[0].mxu0
    %213 = vmatprep.mubr.f32.mxu0 0.0
    %214 = vmatmul.mubr.f32.gmra.mrb[0].mxu0 %v85
    %v215 = vpop.f32.mrb[0].mxu0
    %v216 = vadd.f32 0.0, %v215
    %v217 = vpop.f32.mrb[0].mxu0
    %218 = vmatprep.mubr.f32.mxu0 0.0
    %219 = vmatmul.mubr.f32.gmra.mrb[0].mxu0 %v86
    %v220 = vpop.f32.mrb[0].mxu0
    %v221 = vadd.f32 0.0, %v220
    %v222 = vpop.f32.mrb[0].mxu0
    %223 = vmatprep.mubr.f32.mxu0 0.0
    %224 = vmatmul.mubr.f32.gmra.mrb[0].mxu0 %v87
    %v225 = vpop.f32.mrb[0].mxu0
    %v226 = vadd.f32 0.0, %v225
    %v227 = vpop.f32.mrb[0].mxu0
    %228 = vmatprep.mubr.f32.mxu0 0.0
    %229 = vmatmul.mubr.f32.gmra.mrb[0].mxu0 %v88
    %v230 = vpop.f32.mrb[0].mxu0
    %v231 = vadd.f32 0.0, %v230
    %v232 = vpop.f32.mrb[0].mxu0
    %233 = vmatprep.mubr.f32.mxu0 0.0
    %234 = vmatmul.mubr.f32.gmra.mrb[0].mxu0 %v89
    %v235 = vpop.f32.mrb[0].mxu0
    %v236 = vadd.f32 0.0, %v235
    %v237 = vpop.f32.mrb[0].mxu0
    %238 = vmatprep.mubr.f32.mxu0 0.0
    %239 = vmatmul.mubr.f32.gmra.mrb[0].mxu0 %v90
    %v240 = vpop.f32.mrb[0].mxu0
    %v241 = vadd.f32 0.0, %v240
    %v242 = vpop.f32.mrb[0].mxu0
    %243 = vmatprep.mubr.f32.mxu0 0.0
    %244 = vmatmul.mubr.f32.gmra.mrb[0].mxu0 %v91
    %v245 = vpop.f32.mrb[0].mxu0
    %v246 = vadd.f32 0.0, %v245
    %v247 = vpop.f32.mrb[0].mxu0
    %248 = vmatprep.mubr.f32.mxu0 0.0
    %249 = vmatmul.mubr.f32.gmra.mrb[0].mxu0 %v92
    %v250 = vpop.f32.mrb[0].mxu0
    %v251 = vadd.f32 0.0, %v250
    %v252 = vpop.f32.mrb[0].mxu0
    %253 = vdwg.mxu0
    %254 = vst [vmem:[#allocation10] sm:$0xff] %v176
    %255 = vst [vmem:[#allocation10 + $0x8] sm:$0xff] %v181
    %256 = vst [vmem:[#allocation10 + $0x10] sm:$0xff] %v186
    %257 = vst [vmem:[#allocation10 + $0x18] sm:$0xff] %v191
    %258 = vst [vmem:[#allocation10 + $0x20] sm:$0xff] %v196
    %259 = vst [vmem:[#allocation10 + $0x28] sm:$0xff] %v201
    %260 = vst [vmem:[#allocation10 + $0x30] sm:$0xff] %v206
    %261 = vst [vmem:[#allocation10 + $0x38] sm:$0xff] %v211
    %262 = vst [vmem:[#allocation10 + $0x40] sm:$0xff] %v216
    %263 = vst [vmem:[#allocation10 + $0x48] sm:$0xff] %v221
    %264 = vst [vmem:[#allocation10 + $0x50] sm:$0xff] %v226
    %265 = vst [vmem:[#allocation10 + $0x58] sm:$0xff] %v231
    %266 = vst [vmem:[#allocation10 + $0x60] sm:$0xff] %v236
    %267 = vst [vmem:[#allocation10 + $0x68] sm:$0xff] %v241
    %268 = vst [vmem:[#allocation10 + $0x70] sm:$0xff] %v246
    %269 = vst [vmem:[#allocation10 + $0x78] sm:$0xff] %v251
    %v270 = vld [vmem:[#allocation7] sm:$0xff]
    %v271 = vld [vmem:[#allocation7 + $0x8] sm:$0xff]
    %v272 = vld [vmem:[#allocation7 + $0x10] sm:$0xff]
    %v273 = vld [vmem:[#allocation7 + $0x18] sm:$0xff]
    %v274 = vld [vmem:[#allocation7 + $0x20] sm:$0xff]
    %v275 = vld [vmem:[#allocation7 + $0x28] sm:$0xff]
    %v276 = vld [vmem:[#allocation7 + $0x30] sm:$0xff]
    %v277 = vld [vmem:[#allocation7 + $0x38] sm:$0xff]
    %v278 = vld [vmem:[#allocation7 + $0x40] sm:$0xff]
    %v279 = vld [vmem:[#allocation7 + $0x48] sm:$0xff]
    %v280 = vld [vmem:[#allocation7 + $0x50] sm:$0xff]
    %v281 = vld [vmem:[#allocation7 + $0x58] sm:$0xff]
    %v282 = vld [vmem:[#allocation7 + $0x60] sm:$0xff]
    %v283 = vld [vmem:[#allocation7 + $0x68] sm:$0xff]
    %v284 = vld [vmem:[#allocation7 + $0x70] sm:$0xff]
    %v285 = vld [vmem:[#allocation7 + $0x78] sm:$0xff]
    %286 = vmatprep.subr.mxu0 0.0
    %287 = vmatpush1.xpose.msra.mxu0 %v270
    %288 = vmatprep.subr.mxu0 0.0
    %289 = vmatpush1.xpose.msra.mxu0 %v271
    %290 = vmatprep.subr.mxu0 0.0
    %291 = vmatpush1.xpose.msra.mxu0 %v272
    %292 = vmatprep.subr.mxu0 0.0
    %293 = vmatpush1.xpose.msra.mxu0 %v273
    %294 = vmatprep.subr.mxu0 0.0
    %295 = vmatpush1.xpose.msra.mxu0 %v274
    %296 = vmatprep.subr.mxu0 0.0
    %297 = vmatpush1.xpose.msra.mxu0 %v275
    %298 = vmatprep.subr.mxu0 0.0
    %299 = vmatpush1.xpose.msra.mxu0 %v276
    %300 = vmatprep.subr.mxu0 0.0
    %301 = vmatpush1.xpose.msra.mxu0 %v277
    %302 = vmatprep.subr.mxu0 0.0
    %303 = vmatpush1.xpose.msra.mxu0 %v278
    %304 = vmatprep.subr.mxu0 0.0
    %305 = vmatpush1.xpose.msra.mxu0 %v279
    %306 = vmatprep.subr.mxu0 0.0
    %307 = vmatpush1.xpose.msra.mxu0 %v280
    %308 = vmatprep.subr.mxu0 0.0
    %309 = vmatpush1.xpose.msra.mxu0 %v281
    %310 = vmatprep.subr.mxu0 0.0
    %311 = vmatpush1.xpose.msra.mxu0 %v282
    %312 = vmatprep.subr.mxu0 0.0
    %313 = vmatpush1.xpose.msra.mxu0 %v283
    %314 = vmatprep.subr.mxu0 0.0
    %315 = vmatpush1.xpose.msra.mxu0 %v284
    %316 = vmatprep.subr.mxu0 0.0
    %317 = vmatpush1.xpose.msra.mxu0 %v285
    %318 = vmatprep.subr.mxu0 0.0
    %319 = vmatpush1.xpose.msra.mxu0 0.0
    %320 = vmatprep.subr.mxu0 0.0
    %321 = vmatpush1.xpose.msra.mxu0 0.0
    %322 = vmatprep.subr.mxu0 0.0
    %323 = vmatpush1.xpose.msra.mxu0 0.0
    %324 = vmatprep.subr.mxu0 0.0
    %325 = vmatpush1.xpose.msra.mxu0 0.0
    %326 = vmatprep.subr.mxu0 0.0
    %327 = vmatpush1.xpose.msra.mxu0 0.0
    %328 = vmatprep.subr.mxu0 0.0
    %329 = vmatpush1.xpose.msra.mxu0 0.0
    %330 = vmatprep.subr.mxu0 0.0
    %331 = vmatpush1.xpose.msra.mxu0 0.0
    %332 = vmatprep.subr.mxu0 0.0
    %333 = vmatpush1.xpose.msra.mxu0 0.0
    %334 = vmatprep.subr.mxu0 0.0
    %335 = vmatpush1.xpose.msra.mxu0 0.0
    %336 = vmatprep.subr.mxu0 0.0
    %337 = vmatpush1.xpose.msra.mxu0 0.0
    %338 = vmatprep.subr.mxu0 0.0
    %339 = vmatpush1.xpose.msra.mxu0 0.0
    %340 = vmatprep.subr.mxu0 0.0
    %341 = vmatpush1.xpose.msra.mxu0 0.0
    %342 = vmatprep.subr.mxu0 0.0
    %343 = vmatpush1.xpose.msra.mxu0 0.0
    %344 = vmatprep.subr.mxu0 0.0
    %345 = vmatpush1.xpose.msra.mxu0 0.0
    %346 = vmatprep.subr.mxu0 0.0
    %347 = vmatpush1.xpose.msra.mxu0 0.0
    %348 = vmatprep.subr.mxu0 0.0
    %349 = vmatpush1.xpose.msra.mxu0 0.0
    %350 = vmatprep.mubr.f32.mxu0 0.0
    %351 = vmatmul.mubr.f32.gmra.mrb[0].mxu0 %v77
    %v352 = vpop.f32.mrb[0].mxu0
    %v353 = vadd.f32 0.0, %v352
    %v354 = vpop.f32.mrb[0].mxu0
    %355 = vmatprep.mubr.f32.mxu0 0.0
    %356 = vmatmul.mubr.f32.gmra.mrb[0].mxu0 %v78
    %v357 = vpop.f32.mrb[0].mxu0
    %v358 = vadd.f32 0.0, %v357
    %v359 = vpop.f32.mrb[0].mxu0
    %360 = vmatprep.mubr.f32.mxu0 0.0
    %361 = vmatmul.mubr.f32.gmra.mrb[0].mxu0 %v79
    %v362 = vpop.f32.mrb[0].mxu0
    %v363 = vadd.f32 0.0, %v362
    %v364 = vpop.f32.mrb[0].mxu0
    %365 = vmatprep.mubr.f32.mxu0 0.0
    %366 = vmatmul.mubr.f32.gmra.mrb[0].mxu0 %v80
    %v367 = vpop.f32.mrb[0].mxu0
    %v368 = vadd.f32 0.0, %v367
    %v369 = vpop.f32.mrb[0].mxu0
    %370 = vmatprep.mubr.f32.mxu0 0.0
    %371 = vmatmul.mubr.f32.gmra.mrb[0].mxu0 %v81
    %v372 = vpop.f32.mrb[0].mxu0
    %v373 = vadd.f32 0.0, %v372
    %v374 = vpop.f32.mrb[0].mxu0
    %375 = vmatprep.mubr.f32.mxu0 0.0
    %376 = vmatmul.mubr.f32.gmra.mrb[0].mxu0 %v82
    %v377 = vpop.f32.mrb[0].mxu0
    %v378 = vadd.f32 0.0, %v377
    %v379 = vpop.f32.mrb[0].mxu0
    %380 = vmatprep.mubr.f32.mxu0 0.0
    %381 = vmatmul.mubr.f32.gmra.mrb[0].mxu0 %v83
    %v382 = vpop.f32.mrb[0].mxu0
    %v383 = vadd.f32 0.0, %v382
    %v384 = vpop.f32.mrb[0].mxu0
    %385 = vmatprep.mubr.f32.mxu0 0.0
    %386 = vmatmul.mubr.f32.gmra.mrb[0].mxu0 %v84
    %v387 = vpop.f32.mrb[0].mxu0
    %v388 = vadd.f32 0.0, %v387
    %v389 = vpop.f32.mrb[0].mxu0
    %390 = vmatprep.mubr.f32.mxu0 0.0
    %391 = vmatmul.mubr.f32.gmra.mrb[0].mxu0 %v85
    %v392 = vpop.f32.mrb[0].mxu0
    %v393 = vadd.f32 0.0, %v392
    %v394 = vpop.f32.mrb[0].mxu0
    %395 = vmatprep.mubr.f32.mxu0 0.0
    %396 = vmatmul.mubr.f32.gmra.mrb[0].mxu0 %v86
    %v397 = vpop.f32.mrb[0].mxu0
    %v398 = vadd.f32 0.0, %v397
    %v399 = vpop.f32.mrb[0].mxu0
    %400 = vmatprep.mubr.f32.mxu0 0.0
    %401 = vmatmul.mubr.f32.gmra.mrb[0].mxu0 %v87
    %v402 = vpop.f32.mrb[0].mxu0
    %v403 = vadd.f32 0.0, %v402
    %v404 = vpop.f32.mrb[0].mxu0
    %405 = vmatprep.mubr.f32.mxu0 0.0
    %406 = vmatmul.mubr.f32.gmra.mrb[0].mxu0 %v88
    %v407 = vpop.f32.mrb[0].mxu0
    %v408 = vadd.f32 0.0, %v407
    %v409 = vpop.f32.mrb[0].mxu0
    %410 = vmatprep.mubr.f32.mxu0 0.0
    %411 = vmatmul.mubr.f32.gmra.mrb[0].mxu0 %v89
    %v412 = vpop.f32.mrb[0].mxu0
    %v413 = vadd.f32 0.0, %v412
    %v414 = vpop.f32.mrb[0].mxu0
    %415 = vmatprep.mubr.f32.mxu0 0.0
    %416 = vmatmul.mubr.f32.gmra.mrb[0].mxu0 %v90
    %v417 = vpop.f32.mrb[0].mxu0
    %v418 = vadd.f32 0.0, %v417
    %v419 = vpop.f32.mrb[0].mxu0
    %420 = vmatprep.mubr.f32.mxu0 0.0
    %421 = vmatmul.mubr.f32.gmra.mrb[0].mxu0 %v91
    %v422 = vpop.f32.mrb[0].mxu0
    %v423 = vadd.f32 0.0, %v422
    %v424 = vpop.f32.mrb[0].mxu0
    %425 = vmatprep.mubr.f32.mxu0 0.0
    %426 = vmatmul.mubr.f32.gmra.mrb[0].mxu0 %v92
    %v427 = vpop.f32.mrb[0].mxu0
    %v428 = vadd.f32 0.0, %v427
    %v429 = vpop.f32.mrb[0].mxu0
    %430 = vdwg.mxu0
    %431 = vst [vmem:[#allocation11] sm:$0xff] %v353
    %432 = vst [vmem:[#allocation11 + $0x8] sm:$0xff] %v358
    %433 = vst [vmem:[#allocation11 + $0x10] sm:$0xff] %v363
    %434 = vst [vmem:[#allocation11 + $0x18] sm:$0xff] %v368
    %435 = vst [vmem:[#allocation11 + $0x20] sm:$0xff] %v373
    %436 = vst [vmem:[#allocation11 + $0x28] sm:$0xff] %v378
    %437 = vst [vmem:[#allocation11 + $0x30] sm:$0xff] %v383
    %438 = vst [vmem:[#allocation11 + $0x38] sm:$0xff] %v388
    %439 = vst [vmem:[#allocation11 + $0x40] sm:$0xff] %v393
    %440 = vst [vmem:[#allocation11 + $0x48] sm:$0xff] %v398
    %441 = vst [vmem:[#allocation11 + $0x50] sm:$0xff] %v403
    %442 = vst [vmem:[#allocation11 + $0x58] sm:$0xff] %v408
    %443 = vst [vmem:[#allocation11 + $0x60] sm:$0xff] %v413
    %444 = vst [vmem:[#allocation11 + $0x68] sm:$0xff] %v418
    %445 = vst [vmem:[#allocation11 + $0x70] sm:$0xff] %v423
    %446 = vst [vmem:[#allocation11 + $0x78] sm:$0xff] %v428
    %v447 = vld [vmem:[#allocation8] sm:$0xff]
    %v448 = vld [vmem:[#allocation8 + $0x8] sm:$0xff]
    %v449 = vld [vmem:[#allocation8 + $0x10] sm:$0xff]
    %v450 = vld [vmem:[#allocation8 + $0x18] sm:$0xff]
    %v451 = vld [vmem:[#allocation8 + $0x20] sm:$0xff]
    %v452 = vld [vmem:[#allocation8 + $0x28] sm:$0xff]
    %v453 = vld [vmem:[#allocation8 + $0x30] sm:$0xff]
    %v454 = vld [vmem:[#allocation8 + $0x38] sm:$0xff]
    %v455 = vld [vmem:[#allocation8 + $0x40] sm:$0xff]
    %v456 = vld [vmem:[#allocation8 + $0x48] sm:$0xff]
    %v457 = vld [vmem:[#allocation8 + $0x50] sm:$0xff]
    %v458 = vld [vmem:[#allocation8 + $0x58] sm:$0xff]
    %v459 = vld [vmem:[#allocation8 + $0x60] sm:$0xff]
    %v460 = vld [vmem:[#allocation8 + $0x68] sm:$0xff]
    %v461 = vld [vmem:[#allocation8 + $0x70] sm:$0xff]
    %v462 = vld [vmem:[#allocation8 + $0x78] sm:$0xff]
    %463 = vmatprep.subr.mxu0 0.0
    %464 = vmatpush1.xpose.msra.mxu0 %v447
    %465 = vmatprep.subr.mxu0 0.0
    %466 = vmatpush1.xpose.msra.mxu0 %v448
    %467 = vmatprep.subr.mxu0 0.0
    %468 = vmatpush1.xpose.msra.mxu0 %v449
    %469 = vmatprep.subr.mxu0 0.0
    %470 = vmatpush1.xpose.msra.mxu0 %v450
    %471 = vmatprep.subr.mxu0 0.0
    %472 = vmatpush1.xpose.msra.mxu0 %v451
    %473 = vmatprep.subr.mxu0 0.0
    %474 = vmatpush1.xpose.msra.mxu0 %v452
    %475 = vmatprep.subr.mxu0 0.0
    %476 = vmatpush1.xpose.msra.mxu0 %v453
    %477 = vmatprep.subr.mxu0 0.0
    %478 = vmatpush1.xpose.msra.mxu0 %v454
    %479 = vmatprep.subr.mxu0 0.0
    %480 = vmatpush1.xpose.msra.mxu0 %v455
    %481 = vmatprep.subr.mxu0 0.0
    %482 = vmatpush1.xpose.msra.mxu0 %v456
    %483 = vmatprep.subr.mxu0 0.0
    %484 = vmatpush1.xpose.msra.mxu0 %v457
    %485 = vmatprep.subr.mxu0 0.0
    %486 = vmatpush1.xpose.msra.mxu0 %v458
    %487 = vmatprep.subr.mxu0 0.0
    %488 = vmatpush1.xpose.msra.mxu0 %v459
    %489 = vmatprep.subr.mxu0 0.0
    %490 = vmatpush1.xpose.msra.mxu0 %v460
    %491 = vmatprep.subr.mxu0 0.0
    %492 = vmatpush1.xpose.msra.mxu0 %v461
    %493 = vmatprep.subr.mxu0 0.0
    %494 = vmatpush1.xpose.msra.mxu0 %v462
    %495 = vmatprep.subr.mxu0 0.0
    %496 = vmatpush1.xpose.msra.mxu0 0.0
    %497 = vmatprep.subr.mxu0 0.0
    %498 = vmatpush1.xpose.msra.mxu0 0.0
    %499 = vmatprep.subr.mxu0 0.0
    %500 = vmatpush1.xpose.msra.mxu0 0.0
    %501 = vmatprep.subr.mxu0 0.0
    %502 = vmatpush1.xpose.msra.mxu0 0.0
    %503 = vmatprep.subr.mxu0 0.0
    %504 = vmatpush1.xpose.msra.mxu0 0.0
    %505 = vmatprep.subr.mxu0 0.0
    %506 = vmatpush1.xpose.msra.mxu0 0.0
    %507 = vmatprep.subr.mxu0 0.0
    %508 = vmatpush1.xpose.msra.mxu0 0.0
    %509 = vmatprep.subr.mxu0 0.0
    %510 = vmatpush1.xpose.msra.mxu0 0.0
    %511 = vmatprep.subr.mxu0 0.0
    %512 = vmatpush1.xpose.msra.mxu0 0.0
    %513 = vmatprep.subr.mxu0 0.0
    %514 = vmatpush1.xpose.msra.mxu0 0.0
    %515 = vmatprep.subr.mxu0 0.0
    %516 = vmatpush1.xpose.msra.mxu0 0.0
    %517 = vmatprep.subr.mxu0 0.0
    %518 = vmatpush1.xpose.msra.mxu0 0.0
    %519 = vmatprep.subr.mxu0 0.0
    %520 = vmatpush1.xpose.msra.mxu0 0.0
    %521 = vmatprep.subr.mxu0 0.0
    %522 = vmatpush1.xpose.msra.mxu0 0.0
    %523 = vmatprep.subr.mxu0 0.0
    %524 = vmatpush1.xpose.msra.mxu0 0.0
    %525 = vmatprep.subr.mxu0 0.0
    %526 = vmatpush1.xpose.msra.mxu0 0.0
    %527 = vmatprep.mubr.f32.mxu0 0.0
    %528 = vmatmul.mubr.f32.gmra.mrb[0].mxu0 %v77
    %v529 = vpop.f32.mrb[0].mxu0
    %v530 = vadd.f32 0.0, %v529
    %v531 = vpop.f32.mrb[0].mxu0
    %532 = vmatprep.mubr.f32.mxu0 0.0
    %533 = vmatmul.mubr.f32.gmra.mrb[0].mxu0 %v78
    %v534 = vpop.f32.mrb[0].mxu0
    %v535 = vadd.f32 0.0, %v534
    %v536 = vpop.f32.mrb[0].mxu0
    %537 = vmatprep.mubr.f32.mxu0 0.0
    %538 = vmatmul.mubr.f32.gmra.mrb[0].mxu0 %v79
    %v539 = vpop.f32.mrb[0].mxu0
    %v540 = vadd.f32 0.0, %v539
    %v541 = vpop.f32.mrb[0].mxu0
    %542 = vmatprep.mubr.f32.mxu0 0.0
    %543 = vmatmul.mubr.f32.gmra.mrb[0].mxu0 %v80
    %v544 = vpop.f32.mrb[0].mxu0
    %v545 = vadd.f32 0.0, %v544
    %v546 = vpop.f32.mrb[0].mxu0
    %547 = vmatprep.mubr.f32.mxu0 0.0
    %548 = vmatmul.mubr.f32.gmra.mrb[0].mxu0 %v81
    %v549 = vpop.f32.mrb[0].mxu0
    %v550 = vadd.f32 0.0, %v549
    %v551 = vpop.f32.mrb[0].mxu0
    %552 = vmatprep.mubr.f32.mxu0 0.0
    %553 = vmatmul.mubr.f32.gmra.mrb[0].mxu0 %v82
    %v554 = vpop.f32.mrb[0].mxu0
    %v555 = vadd.f32 0.0, %v554
    %v556 = vpop.f32.mrb[0].mxu0
    %557 = vmatprep.mubr.f32.mxu0 0.0
    %558 = vmatmul.mubr.f32.gmra.mrb[0].mxu0 %v83
    %v559 = vpop.f32.mrb[0].mxu0
    %v560 = vadd.f32 0.0, %v559
    %v561 = vpop.f32.mrb[0].mxu0
    %562 = vmatprep.mubr.f32.mxu0 0.0
    %563 = vmatmul.mubr.f32.gmra.mrb[0].mxu0 %v84
    %v564 = vpop.f32.mrb[0].mxu0
    %v565 = vadd.f32 0.0, %v564
    %v566 = vpop.f32.mrb[0].mxu0
    %567 = vmatprep.mubr.f32.mxu0 0.0
    %568 = vmatmul.mubr.f32.gmra.mrb[0].mxu0 %v85
    %v569 = vpop.f32.mrb[0].mxu0
    %v570 = vadd.f32 0.0, %v569
    %v571 = vpop.f32.mrb[0].mxu0
    %572 = vmatprep.mubr.f32.mxu0 0.0
    %573 = vmatmul.mubr.f32.gmra.mrb[0].mxu0 %v86
    %v574 = vpop.f32.mrb[0].mxu0
    %v575 = vadd.f32 0.0, %v574
    %v576 = vpop.f32.mrb[0].mxu0
    %577 = vmatprep.mubr.f32.mxu0 0.0
    %578 = vmatmul.mubr.f32.gmra.mrb[0].mxu0 %v87
    %v579 = vpop.f32.mrb[0].mxu0
    %v580 = vadd.f32 0.0, %v579
    %v581 = vpop.f32.mrb[0].mxu0
    %582 = vmatprep.mubr.f32.mxu0 0.0
    %583 = vmatmul.mubr.f32.gmra.mrb[0].mxu0 %v88
    %v584 = vpop.f32.mrb[0].mxu0
    %v585 = vadd.f32 0.0, %v584
    %v586 = vpop.f32.mrb[0].mxu0
    %587 = vmatprep.mubr.f32.mxu0 0.0
    %588 = vmatmul.mubr.f32.gmra.mrb[0].mxu0 %v89
    %v589 = vpop.f32.mrb[0].mxu0
    %v590 = vadd.f32 0.0, %v589
    %v591 = vpop.f32.mrb[0].mxu0
    %592 = vmatprep.mubr.f32.mxu0 0.0
    %593 = vmatmul.mubr.f32.gmra.mrb[0].mxu0 %v90
    %v594 = vpop.f32.mrb[0].mxu0
    %v595 = vadd.f32 0.0, %v594
    %v596 = vpop.f32.mrb[0].mxu0
    %597 = vmatprep.mubr.f32.mxu0 0.0
    %598 = vmatmul.mubr.f32.gmra.mrb[0].mxu0 %v91
    %v599 = vpop.f32.mrb[0].mxu0
    %v600 = vadd.f32 0.0, %v599
    %v601 = vpop.f32.mrb[0].mxu0
    %602 = vmatprep.mubr.f32.mxu0 0.0
    %603 = vmatmul.mubr.f32.gmra.mrb[0].mxu0 %v92
    %v604 = vpop.f32.mrb[0].mxu0
    %v605 = vadd.f32 0.0, %v604
    %v606 = vpop.f32.mrb[0].mxu0
    %607 = vdwg.mxu0
    %608 = vst [vmem:[#allocation13] sm:$0xff] %v530
    %609 = vst [vmem:[#allocation13 + $0x8] sm:$0xff] %v535
    %610 = vst [vmem:[#allocation13 + $0x10] sm:$0xff] %v540
    %611 = vst [vmem:[#allocation13 + $0x18] sm:$0xff] %v545
    %612 = vst [vmem:[#allocation13 + $0x20] sm:$0xff] %v550
    %613 = vst [vmem:[#allocation13 + $0x28] sm:$0xff] %v555
    %614 = vst [vmem:[#allocation13 + $0x30] sm:$0xff] %v560
    %615 = vst [vmem:[#allocation13 + $0x38] sm:$0xff] %v565
    %616 = vst [vmem:[#allocation13 + $0x40] sm:$0xff] %v570
    %617 = vst [vmem:[#allocation13 + $0x48] sm:$0xff] %v575
    %618 = vst [vmem:[#allocation13 + $0x50] sm:$0xff] %v580
    %619 = vst [vmem:[#allocation13 + $0x58] sm:$0xff] %v585
    %620 = vst [vmem:[#allocation13 + $0x60] sm:$0xff] %v590
    %621 = vst [vmem:[#allocation13 + $0x68] sm:$0xff] %v595
    %622 = vst [vmem:[#allocation13 + $0x70] sm:$0xff] %v600
    %623 = vst [vmem:[#allocation13 + $0x78] sm:$0xff] %v605
    // Predicated region
    $region34: #{tpu_custom_call.1} parent=1 // pred_check
      _
    $region35: #{tpu_custom_call.1} parent=1 // pred_check_branch
      %625 = sbr.rel (0) target = $region37
    $region36: #{tpu_custom_call.1} parent=1 // pred_region
      %s627 = ssub.s32 2048, 2048
      %628 = vsyncadd [#allocation4], %s627
      %s629 = sshll.u32 [#allocation10], 4
      %s630 = int_to_ptr.vmem [resolvable:$true] %s629
      %635 = dma.vmem_to_hbm [thread:$0]  %s630, 2048, %s4, [#allocation4], 128, 128, 8
    $region37: #{tpu_custom_call.1} parent=1 // pred_fallthru
      _
    // Predicated region
    $region38: #{tpu_custom_call.1} parent=1 // pred_check
      _
    $region39: #{tpu_custom_call.1} parent=1 // pred_check_branch
      %637 = sbr.rel (0) target = $region41
    $region40: #{tpu_custom_call.1} parent=1 // pred_region
      %s639 = ssub.s32 2048, 2048
      %640 = vsyncadd [#allocation12], %s639
      %s641 = sshll.u32 [#allocation11], 4
      %s642 = int_to_ptr.vmem [resolvable:$true] %s641
      %647 = dma.vmem_to_hbm [thread:$0]  %s642, 2048, %s5, [#allocation12], 128, 128, 8
    $region41: #{tpu_custom_call.1} parent=1 // pred_fallthru
      _
    // Predicated region
    $region42: #{tpu_custom_call.1} parent=1 // pred_check
      _
    $region43: #{tpu_custom_call.1} parent=1 // pred_check_branch
      %649 = sbr.rel (0) target = $region45
    $region44: #{tpu_custom_call.1} parent=1 // pred_region
      %s651 = ssub.s32 2048, 2048
      %652 = vsyncadd [#allocation12], %s651
      %s653 = sshll.u32 [#allocation13], 4
      %s654 = int_to_ptr.vmem [resolvable:$true] %s653
      %659 = dma.vmem_to_hbm [thread:$0]  %s654, 2048, %s6, [#allocation12], 128, 128, 8
    $region45: #{tpu_custom_call.1} parent=1 // pred_fallthru
      _
    // Predicated region
    $region46: #{tpu_custom_call.1} parent=1 // pred_check
      _
    $region47: #{tpu_custom_call.1} parent=1 // pred_check_branch
      %661 = sbr.rel (0) target = $region49
    $region48: #{tpu_custom_call.1} parent=1 // pred_region
      %662 = dma.done [#allocation4], 2048
    $region49: #{tpu_custom_call.1} parent=1 // pred_fallthru
      _
    // Predicated region
    $region50: #{tpu_custom_call.1} parent=1 // pred_check
      _
    $region51: #{tpu_custom_call.1} parent=1 // pred_check_branch
      %664 = sbr.rel (0) target = $region53
    $region52: #{tpu_custom_call.1} parent=1 // pred_region
      %665 = dma.done [#allocation12], 2048
    $region53: #{tpu_custom_call.1} parent=1 // pred_fallthru
      _
    // Predicated region
    $region54: #{tpu_custom_call.1} parent=1 // pred_check
      _
    $region55: #{tpu_custom_call.1} parent=1 // pred_check_branch
      %667 = sbr.rel (0) target = $region57
    $region56: #{tpu_custom_call.1} parent=1 // pred_region
      %668 = dma.done [#allocation12], 2048
    $region57: #{tpu_custom_call.1} parent=1 // pred_fallthru
      _
    %669 = vsyncpa [#allocation3], 1
    %670 = vsyncpa [#allocation6], 1
    %671 = vsyncpa [#allocation9], 1
    %672 = vsyncpa [#allocation4], 1
    %673 = vsyncpa [#allocation12], 1

</llo_original>
